<compile_context>
chip_gen: v5e
topology: v5e:2x2
jax: 0.10.0
libtpu: 0.0.40
codegen_flags: <defaults>
</compile_context>

<pallas_src>
import functools

import numpy as np
import jax
import jax.numpy as jnp
from jax.experimental import pallas as pl
from jax.experimental.pallas import tpu as pltpu


def _smooth_l1(x):
    ax = jnp.abs(x)
    return jnp.where(ax < 1.0, 0.5 * x * x, ax - 0.5)


def _loss_kernel(anc_ref, gt_geo_ref, gt_cat_ref, pred_ref, out_ref, *,
                 iou_threshold, batch_block):
    anc = anc_ref[...]            # (8, A): x0, y0, x1, y1, w, h, cx, cy (lane-dense rows)
    A = anc.shape[1]
    G = gt_geo_ref.shape[1]

    # Batch-invariant anchor quantities, hoisted out of the batch-block loop.
    a_x0 = anc[0:1, :]
    a_y0 = anc[1:2, :]
    a_x1 = anc[2:3, :]
    a_y1 = anc[3:4, :]
    awh = anc[4:6, :]             # (2, A): [w, h]
    acxy = anc[6:8, :]            # (2, A): [cx, cy]
    area_a = awh[0:1, :] * awh[1:2, :]                   # (1, A)

    row = jax.lax.broadcasted_iota(jnp.int32, (G, A), 0)
    lane = jax.lax.broadcasted_iota(jnp.int32, (1, 128), 1)

    # Small static batch block (B <= 8): unrolled Python loop.
    for b in range(batch_block):
        gt_geo = gt_geo_ref[b]    # (G, 4): GT box corners, coords as sublane columns
        gt_cat = gt_cat_ref[b]    # (16, G): [box(4), ldm(10), pad(2)] channel-major
        pred = pred_ref[b]        # (16, A): [cls(2), bbox(4), ldm(10)] channel-major

        g_x0 = gt_geo[:, 0:1]                            # (G, 1)
        g_y0 = gt_geo[:, 1:2]
        g_x1 = gt_geo[:, 2:3]
        g_y1 = gt_geo[:, 3:4]

        # ---- IoU matrix, (G, A): anchors on lanes, GT on sublanes ----
        inter_w = jnp.maximum(jnp.minimum(a_x1, g_x1) - jnp.maximum(a_x0, g_x0), 0.0)
        inter_h = jnp.maximum(jnp.minimum(a_y1, g_y1) - jnp.maximum(a_y0, g_y0), 0.0)
        inter = inter_w * inter_h                        # (G, A)
        area_g = (g_x1 - g_x0) * (g_y1 - g_y0)           # (G, 1)
        union = area_a + area_g - inter
        # NOTE: like the PyTorch/NumPy reference, union == 0 (degenerate / padded
        # GT rows) yields NaN; mask or epsilon-guard upstream if padded GT is possible.
        iou = inter / union                              # (G, A)

        # ---- max / first-argmax over GT (8-sublane reduce), one-hot match matrix ----
        max_iou = jnp.max(iou, axis=0, keepdims=True)    # (1, A)
        first_idx = jnp.min(jnp.where(iou == max_iou, row, G), axis=0, keepdims=True)
        onehot = (row == first_idx).astype(jnp.float32)  # (G, A)

        pos = max_iou >= iou_threshold                   # (1, A)
        posf = pos.astype(jnp.float32)

        # ---- classification: 2-class CE in binary softplus form ----
        # TODO(synk): the PyTorch code passes a float target to nn.CrossEntropyLoss
        # (which would raise at runtime); the intended class-index semantics are used.
        d = pred[1:2, :] - pred[0:1, :]                  # logit1 - logit0
        s = (1.0 - 2.0 * posf) * d
        ce = jnp.maximum(s, 0.0) + jnp.log(1.0 + jnp.exp(-jnp.abs(s)))   # (1, A)

        # ---- matched GT values for every anchor: one fused one-hot matmul (K=3G) ----
        # f32-exact gather: gt = hi + mid + lo (bf16x3 split); the one-hot is exact
        # in bf16 and selects a single (hi, mid, lo) triple per output; the MXU
        # accumulates the three terms in f32 within a single K=3G matmul.
        hi = gt_cat.astype(jnp.bfloat16)
        r1 = gt_cat - hi.astype(jnp.float32)
        mid = r1.astype(jnp.bfloat16)
        lo = (r1 - mid.astype(jnp.float32)).astype(jnp.bfloat16)
        gt3 = jnp.concatenate([hi, mid, lo], axis=1)                       # (16, 3G)
        oh3 = jnp.concatenate([onehot, onehot, onehot], axis=0).astype(jnp.bfloat16)  # (3G, A)
        matched = jnp.dot(gt3, oh3, preferred_element_type=jnp.float32)    # (16, A)

        # ---- bbox regression targets + masked SmoothL1, packed (2,A)/(4,A) ----
        gwh = matched[2:4, :] - matched[0:2, :]          # (2, A): [gw, gh]
        gcxy = matched[0:2, :] + 0.5 * gwh               # (2, A): [gcx, gcy]
        txy = (gcxy - acxy) / awh                        # (2, A)
        twh = jnp.log(jnp.where(pos, gwh / awh, 1.0))    # (2, A), safe log when masked out
        targets = jnp.concatenate([txy, twh], axis=0)    # (4, A)
        reg_per = jnp.sum(_smooth_l1(pred[2:6, :] - targets), axis=0, keepdims=True)   # (1, A)

        # ---- landmark loss: all 10 channels vectorized, then sublane reduce ----
        ldm_per = jnp.sum(_smooth_l1(pred[6:16, :] - matched[4:14, :]),
                          axis=0, keepdims=True)         # (1, A)

        # ---- fold the four full-lane scalar reductions into one (4, A) reduce ----
        stacked = jnp.concatenate([ce, posf, posf * reg_per, posf * ldm_per], axis=0)
        sums = jnp.sum(stacked, axis=1, keepdims=True)   # (4, 1)

        cls_loss = sums[0, 0] / A
        num_pos = sums[1, 0]
        has_pos = num_pos > 0.0
        inv_np = 1.0 / jnp.maximum(num_pos, 1.0)
        reg_loss = jnp.where(has_pos, sums[2, 0] * inv_np * 0.25, 0.0)
        ldm_loss = jnp.where(has_pos, sums[3, 0] * inv_np * 0.1, 0.0)

        # lane-dense (1, 128) output row: [cls, reg, ldm, 0, ...]
        vec = jnp.where(lane == 0, cls_loss,
              jnp.where(lane == 1, reg_loss,
              jnp.where(lane == 2, ldm_loss, 0.0)))
        out_ref[b] = vec.astype(jnp.float32)


def _pick_batch_block(n):
    """Largest B <= 8 dividing n that keeps the grid length >= 2 (v7x megacore)."""
    best = 1
    for b in range(2, min(n, 8) + 1):
        if n % b == 0 and n // b >= 2:
            best = b
    return best


def retinaface_loss(pred_cls, pred_bbox, pred_ldm, anchors, gt_boxes, gt_landmarks,
                    alpha=1.0, beta=1.0, gamma=1.0, iou_threshold=0.5):
    N, A, _ = pred_cls.shape
    G = gt_boxes.shape[1]

    anchors = anchors.astype(jnp.float32)
    aw = anchors[:, 2] - anchors[:, 0]
    ah = anchors[:, 3] - anchors[:, 1]
    anc_feat = jnp.stack(
        [anchors[:, 0], anchors[:, 1], anchors[:, 2], anchors[:, 3],
         aw, ah, anchors[:, 0] + 0.5 * aw, anchors[:, 1] + 0.5 * ah],
        axis=0)                                                        # (8, A)

    gt_geo = gt_boxes.astype(jnp.float32)                              # (N, G, 4)
    gt_cat = jnp.concatenate(
        [jnp.transpose(gt_boxes, (0, 2, 1)).astype(jnp.float32),       # (N, 4, G)
         jnp.transpose(gt_landmarks, (0, 2, 1)).astype(jnp.float32),   # (N, 10, G)
         jnp.zeros((N, 2, G), jnp.float32)], axis=1)                   # (N, 16, G)

    preds = jnp.concatenate(
        [jnp.transpose(pred_cls, (0, 2, 1)),
         jnp.transpose(pred_bbox, (0, 2, 1)),
         jnp.transpose(pred_ldm, (0, 2, 1))], axis=1).astype(jnp.float32)  # (N, 16, A)

    B = _pick_batch_block(N)
    kernel = functools.partial(_loss_kernel, iou_threshold=float(iou_threshold),
                               batch_block=B)

    out = pl.pallas_call(
        kernel,
        out_shape=jax.ShapeDtypeStruct((N, 1, 128), jnp.float32),
        grid=(N // B,),
        in_specs=[
            pl.BlockSpec((8, A), lambda i: (0, 0)),          # anchors (resident)
            pl.BlockSpec((B, G, 4), lambda i: (i, 0, 0)),    # gt boxes (geometry)
            pl.BlockSpec((B, 16, G), lambda i: (i, 0, 0)),   # gt box+ldm channel-major
            pl.BlockSpec((B, 16, A), lambda i: (i, 0, 0)),   # fused predictions
        ],
        out_specs=pl.BlockSpec((B, 1, 128), lambda i: (i, 0, 0)),
        compiler_params=pltpu.CompilerParams(
            dimension_semantics=("parallel",),
            # Let XLA fuse the channel-major relayout of gt_cat / preds into the
            # kernel's input DMA (avoids materializing the transposed slabs in HBM
            # when the backend supports it); harmless hint otherwise.
            allow_input_fusion=[False, False, True, True],
        ),
    )(anc_feat, gt_geo, gt_cat, preds)

    cls_loss = jnp.mean(out[:, 0, 0])
    reg_loss = jnp.mean(out[:, 0, 1])
    ldm_loss = jnp.mean(out[:, 0, 2])
    total = alpha * cls_loss + beta * reg_loss + gamma * ldm_loss
    return total, cls_loss, reg_loss, ldm_loss


def reference_loss(pred_cls, pred_bbox, pred_ldm, anchors, gt_boxes, gt_landmarks,
                   alpha=1.0, beta=1.0, gamma=1.0, iou_threshold=0.5):
    """NumPy reference mirroring the PyTorch module (class-index CE semantics)."""
    pred_cls = np.asarray(pred_cls, np.float32)
    pred_bbox = np.asarray(pred_bbox, np.float32)
    pred_ldm = np.asarray(pred_ldm, np.float32)
    anchors = np.asarray(anchors, np.float32)
    gt_boxes = np.asarray(gt_boxes, np.float32)
    gt_landmarks = np.asarray(gt_landmarks, np.float32)
    N, A, _ = pred_cls.shape

    def sl1(x):
        ax = np.abs(x)
        return np.where(ax < 1.0, 0.5 * x * x, ax - 0.5)

    cls_loss = reg_loss = ldm_loss = 0.0
    for i in range(N):
        b2 = gt_boxes[i]
        ixmin = np.maximum(anchors[:, None, 0], b2[None, :, 0])
        iymin = np.maximum(anchors[:, None, 1], b2[None, :, 1])
        ixmax = np.minimum(anchors[:, None, 2], b2[None, :, 2])
        iymax = np.minimum(anchors[:, None, 3], b2[None, :, 3])
        inter = np.clip(ixmax - ixmin, 0, None) * np.clip(iymax - iymin, 0, None)
        area1 = (anchors[:, 2] - anchors[:, 0]) * (anchors[:, 3] - anchors[:, 1])
        area2 = (b2[:, 2] - b2[:, 0]) * (b2[:, 3] - b2[:, 1])
        iou = inter / (area1[:, None] + area2[None, :] - inter)
        max_iou = iou.max(axis=1)
        idx = iou.argmax(axis=1)
        pos = max_iou >= iou_threshold
        target = pos.astype(np.int64)
        logits = pred_cls[i]
        mx = logits.max(axis=1, keepdims=True)
        lse = mx[:, 0] + np.log(np.exp(logits - mx).sum(axis=1))
        ce = lse - logits[np.arange(A), target]
        cls_loss += ce.mean()
        if pos.sum() > 0:
            a = anchors[pos]
            mb = b2[idx[pos]]
            aw = a[:, 2] - a[:, 0]
            ah = a[:, 3] - a[:, 1]
            acx = a[:, 0] + 0.5 * aw
            acy = a[:, 1] + 0.5 * ah
            gw = mb[:, 2] - mb[:, 0]
            gh = mb[:, 3] - mb[:, 1]
            gcx = mb[:, 0] + 0.5 * gw
            gcy = mb[:, 1] + 0.5 * gh
            t = np.stack([(gcx - acx) / aw, (gcy - acy) / ah,
                          np.log(gw / aw), np.log(gh / ah)], axis=1)
            reg_loss += sl1(pred_bbox[i][pos] - t).mean()
            ml = gt_landmarks[i][idx[pos]]
            ldm_loss += sl1(pred_ldm[i][pos] - ml).mean()
    cls_loss /= N
    reg_loss /= N
    ldm_loss /= N
    total = alpha * cls_loss + beta * reg_loss + gamma * ldm_loss
    return total, cls_loss, reg_loss, ldm_loss


if __name__ == "__main__":
    key = jax.random.PRNGKey(0)
    N, A, G = 2, 128, 8
    keys = jax.random.split(key, 6)

    def make_boxes(k, shape_prefix):
        kc, ks = jax.random.split(k)
        c = jax.random.uniform(kc, shape_prefix + (2,), minval=0.2, maxval=0.8)
        s = jax.random.uniform(ks, shape_prefix + (2,), minval=0.05, maxval=0.3)
        return jnp.concatenate([c - 0.5 * s, c + 0.5 * s], axis=-1)

    anchors = make_boxes(keys[0], (A,))
    gt_boxes = make_boxes(keys[1], (N, G))
    # guarantee some positive anchors in every batch element
    anchors = anchors.at[:G].set(gt_boxes[0]).at[G:2 * G].set(gt_boxes[1])

    gt_landmarks = jax.random.uniform(keys[2], (N, G, 10))
    pred_cls = jax.random.normal(keys[3], (N, A, 2))
    pred_bbox = jax.random.normal(keys[4], (N, A, 4)) * 0.5
    pred_ldm = jax.random.normal(keys[5], (N, A, 10)) * 0.5

    total, cls_l, reg_l, ldm_l = jax.block_until_ready(
        retinaface_loss(pred_cls, pred_bbox, pred_ldm, anchors, gt_boxes, gt_landmarks))

    ref = reference_loss(pred_cls, pred_bbox, pred_ldm, anchors, gt_boxes, gt_landmarks)
    got = np.array([float(total), float(cls_l), float(reg_l), float(ldm_l)])
    exp = np.array([float(v) for v in ref])
    np.testing.assert_allclose(got, exp, rtol=1e-4, atol=1e-5)

    print("KERNEL_OK")
</pallas_src>

<mosaic_0001>
module attributes {stable_mosaic.version = 11 : i64} {
  func.func @_loss_kernel(%arg0: i32, %arg1: memref<8x128xf32, #tpu.memory_space<vmem>>, %arg2: memref<1x8x4xf32, #tpu.memory_space<vmem>>, %arg3: memref<1x16x8xf32, #tpu.memory_space<vmem>>, %arg4: memref<1x16x128xf32, #tpu.memory_space<vmem>>, %arg5: memref<1x1x128xf32, #tpu.memory_space<vmem>>) attributes {dimension_semantics = [#tpu.dimension_semantics<parallel>], iteration_bounds = array<i64: 2>, scalar_prefetch = 0 : i64, scratch_operands = 0 : i64, tpu.core_type = #tpu.core_type<tc>, window_params = [{pipeline_mode = #tpu.pipeline_mode<synchronous>, transform_indices = @transform_0, window_bounds = array<i64: 8, 128>}, {transform_indices = @transform_1, window_bounds = array<i64: 1, 8, 4>}, {transform_indices = @transform_2, window_bounds = array<i64: 1, 16, 8>}, {transform_indices = @transform_3, window_bounds = array<i64: 1, 16, 128>}, {transform_indices = @transform_4, window_bounds = array<i64: 1, 1, 128>}]} {
    %c0 = arith.constant 0 : index
    %c0_0 = arith.constant 0 : index
    %0 = vector.load %arg1[%c0, %c0_0] : memref<8x128xf32, #tpu.memory_space<vmem>>, vector<8x128xf32>
    %1 = vector.extract_strided_slice %0 {offsets = [0, 0], sizes = [1, 128], strides = [1, 1]} : vector<8x128xf32> to vector<1x128xf32>
    %2 = vector.extract_strided_slice %0 {offsets = [1, 0], sizes = [1, 128], strides = [1, 1]} : vector<8x128xf32> to vector<1x128xf32>
    %3 = vector.extract_strided_slice %0 {offsets = [2, 0], sizes = [1, 128], strides = [1, 1]} : vector<8x128xf32> to vector<1x128xf32>
    %4 = vector.extract_strided_slice %0 {offsets = [3, 0], sizes = [1, 128], strides = [1, 1]} : vector<8x128xf32> to vector<1x128xf32>
    %5 = vector.extract_strided_slice %0 {offsets = [4, 0], sizes = [2, 128], strides = [1, 1]} : vector<8x128xf32> to vector<2x128xf32>
    %6 = vector.extract_strided_slice %0 {offsets = [6, 0], sizes = [2, 128], strides = [1, 1]} : vector<8x128xf32> to vector<2x128xf32>
    %7 = vector.extract_strided_slice %5 {offsets = [0, 0], sizes = [1, 128], strides = [1, 1]} : vector<2x128xf32> to vector<1x128xf32>
    %8 = vector.extract_strided_slice %5 {offsets = [1, 0], sizes = [1, 128], strides = [1, 1]} : vector<2x128xf32> to vector<1x128xf32>
    %9 = arith.mulf %7, %8 : vector<1x128xf32>
    %10 = tpu.iota {dimensions = array<i32: 0>} : vector<8x128xi32>
    %11 = tpu.iota {dimensions = array<i32: 1>} : vector<1x128xi32>
    %c0_1 = arith.constant 0 : index
    %c0_2 = arith.constant 0 : index
    %c0_3 = arith.constant 0 : index
    %12 = vector.load %arg2[%c0_1, %c0_2, %c0_3] : memref<1x8x4xf32, #tpu.memory_space<vmem>>, vector<1x8x4xf32>
    %13 = vector.shape_cast %12 : vector<1x8x4xf32> to vector<8x4xf32>
    %c0_4 = arith.constant 0 : index
    %c0_5 = arith.constant 0 : index
    %c0_6 = arith.constant 0 : index
    %14 = vector.load %arg3[%c0_4, %c0_5, %c0_6] : memref<1x16x8xf32, #tpu.memory_space<vmem>>, vector<1x16x8xf32>
    %15 = vector.shape_cast %14 : vector<1x16x8xf32> to vector<16x8xf32>
    %c0_7 = arith.constant 0 : index
    %c0_8 = arith.constant 0 : index
    %c0_9 = arith.constant 0 : index
    %16 = vector.load %arg4[%c0_7, %c0_8, %c0_9] : memref<1x16x128xf32, #tpu.memory_space<vmem>>, vector<1x16x128xf32>
    %17 = vector.shape_cast %16 : vector<1x16x128xf32> to vector<16x128xf32>
    %18 = vector.extract_strided_slice %13 {offsets = [0, 0], sizes = [8, 1], strides = [1, 1]} : vector<8x4xf32> to vector<8x1xf32>
    %19 = vector.extract_strided_slice %13 {offsets = [0, 1], sizes = [8, 1], strides = [1, 1]} : vector<8x4xf32> to vector<8x1xf32>
    %20 = vector.extract_strided_slice %13 {offsets = [0, 2], sizes = [8, 1], strides = [1, 1]} : vector<8x4xf32> to vector<8x1xf32>
    %21 = vector.extract_strided_slice %13 {offsets = [0, 3], sizes = [8, 1], strides = [1, 1]} : vector<8x4xf32> to vector<8x1xf32>
    %22 = vector.broadcast %3 : vector<1x128xf32> to vector<8x128xf32>
    %23 = vector.broadcast %20 : vector<8x1xf32> to vector<8x128xf32>
    %24 = arith.minimumf %22, %23 : vector<8x128xf32>
    %25 = vector.broadcast %1 : vector<1x128xf32> to vector<8x128xf32>
    %26 = vector.broadcast %18 : vector<8x1xf32> to vector<8x128xf32>
    %27 = arith.maximumf %25, %26 : vector<8x128xf32>
    %28 = arith.subf %24, %27 : vector<8x128xf32>
    %cst = arith.constant 0.000000e+00 : f32
    %29 = vector.broadcast %cst : f32 to vector<8x128xf32>
    %30 = arith.maximumf %28, %29 : vector<8x128xf32>
    %31 = vector.broadcast %4 : vector<1x128xf32> to vector<8x128xf32>
    %32 = vector.broadcast %21 : vector<8x1xf32> to vector<8x128xf32>
    %33 = arith.minimumf %31, %32 : vector<8x128xf32>
    %34 = vector.broadcast %2 : vector<1x128xf32> to vector<8x128xf32>
    %35 = vector.broadcast %19 : vector<8x1xf32> to vector<8x128xf32>
    %36 = arith.maximumf %34, %35 : vector<8x128xf32>
    %37 = arith.subf %33, %36 : vector<8x128xf32>
    %cst_10 = arith.constant 0.000000e+00 : f32
    %38 = vector.broadcast %cst_10 : f32 to vector<8x128xf32>
    %39 = arith.maximumf %37, %38 : vector<8x128xf32>
    %40 = arith.mulf %30, %39 : vector<8x128xf32>
    %41 = arith.subf %20, %18 : vector<8x1xf32>
    %42 = arith.subf %21, %19 : vector<8x1xf32>
    %43 = arith.mulf %41, %42 : vector<8x1xf32>
    %44 = vector.broadcast %9 : vector<1x128xf32> to vector<8x128xf32>
    %45 = vector.broadcast %43 : vector<8x1xf32> to vector<8x128xf32>
    %46 = arith.addf %44, %45 : vector<8x128xf32>
    %47 = arith.subf %46, %40 : vector<8x128xf32>
    %48 = arith.divf %40, %47 : vector<8x128xf32>
    %cst_11 = arith.constant dense<0xFF800000> : vector<128xf32>
    %49 = vector.multi_reduction <maximumf>, %48, %cst_11 [0] : vector<8x128xf32> to vector<128xf32>
    %50 = vector.shape_cast %49 : vector<128xf32> to vector<1x128xf32>
    %51 = vector.broadcast %50 : vector<1x128xf32> to vector<8x128xf32>
    %52 = arith.cmpf oeq, %48, %51 : vector<8x128xf32>
    %c8_i32 = arith.constant 8 : i32
    %53 = vector.broadcast %c8_i32 : i32 to vector<8x128xi32>
    %54 = arith.select %52, %10, %53 : vector<8x128xi1>, vector<8x128xi32>
    %cst_12 = arith.constant dense<2147483647> : vector<128xi32>
    %55 = vector.multi_reduction <minsi>, %54, %cst_12 [0] : vector<8x128xi32> to vector<128xi32>
    %56 = vector.shape_cast %55 : vector<128xi32> to vector<1x128xi32>
    %57 = vector.broadcast %56 : vector<1x128xi32> to vector<8x128xi32>
    %58 = arith.cmpi eq, %10, %57 : vector<8x128xi32>
    %59 = arith.extui %58 : vector<8x128xi1> to vector<8x128xi32>
    %60 = arith.sitofp %59 : vector<8x128xi32> to vector<8x128xf32>
    %cst_13 = arith.constant 5.000000e-01 : f32
    %61 = vector.broadcast %cst_13 : f32 to vector<1x128xf32>
    %62 = arith.cmpf oge, %50, %61 : vector<1x128xf32>
    %63 = arith.extui %62 : vector<1x128xi1> to vector<1x128xi32>
    %64 = arith.sitofp %63 : vector<1x128xi32> to vector<1x128xf32>
    %65 = vector.extract_strided_slice %17 {offsets = [1, 0], sizes = [1, 128], strides = [1, 1]} : vector<16x128xf32> to vector<1x128xf32>
    %66 = vector.extract_strided_slice %17 {offsets = [0, 0], sizes = [1, 128], strides = [1, 1]} : vector<16x128xf32> to vector<1x128xf32>
    %67 = arith.subf %65, %66 : vector<1x128xf32>
    %cst_14 = arith.constant 2.000000e+00 : f32
    %68 = vector.broadcast %cst_14 : f32 to vector<1x128xf32>
    %69 = arith.mulf %68, %64 : vector<1x128xf32>
    %cst_15 = arith.constant 1.000000e+00 : f32
    %70 = vector.broadcast %cst_15 : f32 to vector<1x128xf32>
    %71 = arith.subf %70, %69 : vector<1x128xf32>
    %72 = arith.mulf %71, %67 : vector<1x128xf32>
    %cst_16 = arith.constant 0.000000e+00 : f32
    %73 = vector.broadcast %cst_16 : f32 to vector<1x128xf32>
    %74 = arith.maximumf %72, %73 : vector<1x128xf32>
    %75 = math.absf %72 : vector<1x128xf32>
    %cst_17 = arith.constant 0.000000e+00 : f32
    %76 = vector.broadcast %cst_17 : f32 to vector<1x128xf32>
    %77 = arith.subf %76, %75 : vector<1x128xf32>
    %78 = math.exp %77 : vector<1x128xf32>
    %cst_18 = arith.constant 1.000000e+00 : f32
    %79 = vector.broadcast %cst_18 : f32 to vector<1x128xf32>
    %80 = arith.addf %79, %78 : vector<1x128xf32>
    %81 = math.log %80 : vector<1x128xf32>
    %82 = arith.addf %74, %81 : vector<1x128xf32>
    %83 = arith.truncf %15 : vector<16x8xf32> to vector<16x8xbf16>
    %84 = arith.extf %83 : vector<16x8xbf16> to vector<16x8xf32>
    %85 = arith.subf %15, %84 : vector<16x8xf32>
    %86 = arith.truncf %85 : vector<16x8xf32> to vector<16x8xbf16>
    %87 = arith.extf %86 : vector<16x8xbf16> to vector<16x8xf32>
    %88 = arith.subf %85, %87 : vector<16x8xf32>
    %89 = arith.truncf %88 : vector<16x8xf32> to vector<16x8xbf16>
    %90 = tpu.concatenate %83, %86, %89 in 1 : vector<16x8xbf16>, vector<16x8xbf16>, vector<16x8xbf16> -> vector<16x24xbf16>
    %91 = tpu.concatenate %60, %60, %60 in 0 : vector<8x128xf32>, vector<8x128xf32>, vector<8x128xf32> -> vector<24x128xf32>
    %92 = arith.truncf %91 : vector<24x128xf32> to vector<24x128xbf16>
    %cst_19 = arith.constant dense<0.000000e+00> : vector<16x128xf32>
    %93 = tpu.matmul %90, %92, %cst_19 {dimension_numbers = #tpu.dot_dimension_numbers<[1], [0], [0], [1], [0, 0, 1, 1], [], []>} : vector<16x24xbf16>, vector<24x128xbf16>, vector<16x128xf32> -> vector<16x128xf32>
    %94 = vector.extract_strided_slice %93 {offsets = [2, 0], sizes = [2, 128], strides = [1, 1]} : vector<16x128xf32> to vector<2x128xf32>
    %95 = vector.extract_strided_slice %93 {offsets = [0, 0], sizes = [2, 128], strides = [1, 1]} : vector<16x128xf32> to vector<2x128xf32>
    %96 = arith.subf %94, %95 : vector<2x128xf32>
    %97 = vector.extract_strided_slice %93 {offsets = [0, 0], sizes = [2, 128], strides = [1, 1]} : vector<16x128xf32> to vector<2x128xf32>
    %cst_20 = arith.constant 5.000000e-01 : f32
    %98 = vector.broadcast %cst_20 : f32 to vector<2x128xf32>
    %99 = arith.mulf %98, %96 : vector<2x128xf32>
    %100 = arith.addf %97, %99 : vector<2x128xf32>
    %101 = arith.subf %100, %6 : vector<2x128xf32>
    %102 = arith.divf %101, %5 : vector<2x128xf32>
    %103 = arith.divf %96, %5 : vector<2x128xf32>
    %cst_21 = arith.constant 1.000000e+00 : f32
    %104 = vector.shape_cast %62 : vector<1x128xi1> to vector<1x128xi1>
    %105 = vector.broadcast %104 : vector<1x128xi1> to vector<2x128xi1>
    %106 = vector.broadcast %cst_21 : f32 to vector<2x128xf32>
    %107 = arith.select %105, %103, %106 : vector<2x128xi1>, vector<2x128xf32>
    %108 = math.log %107 : vector<2x128xf32>
    %109 = tpu.concatenate %102, %108 in 0 : vector<2x128xf32>, vector<2x128xf32> -> vector<4x128xf32>
    %110 = vector.extract_strided_slice %17 {offsets = [2, 0], sizes = [4, 128], strides = [1, 1]} : vector<16x128xf32> to vector<4x128xf32>
    %111 = arith.subf %110, %109 : vector<4x128xf32>
    %112 = math.absf %111 : vector<4x128xf32>
    %cst_22 = arith.constant 1.000000e+00 : f32
    %113 = vector.broadcast %cst_22 : f32 to vector<4x128xf32>
    %114 = arith.cmpf olt, %112, %113 : vector<4x128xf32>
    %cst_23 = arith.constant 5.000000e-01 : f32
    %115 = vector.broadcast %cst_23 : f32 to vector<4x128xf32>
    %116 = arith.mulf %115, %111 : vector<4x128xf32>
    %117 = arith.mulf %116, %111 : vector<4x128xf32>
    %cst_24 = arith.constant 5.000000e-01 : f32
    %118 = vector.broadcast %cst_24 : f32 to vector<4x128xf32>
    %119 = arith.subf %112, %118 : vector<4x128xf32>
    %120 = arith.select %114, %117, %119 : vector<4x128xi1>, vector<4x128xf32>
    %cst_25 = arith.constant dense<0.000000e+00> : vector<128xf32>
    %121 = vector.multi_reduction <add>, %120, %cst_25 [0] : vector<4x128xf32> to vector<128xf32>
    %122 = vector.shape_cast %121 : vector<128xf32> to vector<1x128xf32>
    %123 = vector.extract_strided_slice %17 {offsets = [6, 0], sizes = [10, 128], strides = [1, 1]} : vector<16x128xf32> to vector<10x128xf32>
    %124 = vector.extract_strided_slice %93 {offsets = [4, 0], sizes = [10, 128], strides = [1, 1]} : vector<16x128xf32> to vector<10x128xf32>
    %125 = arith.subf %123, %124 : vector<10x128xf32>
    %126 = math.absf %125 : vector<10x128xf32>
    %cst_26 = arith.constant 1.000000e+00 : f32
    %127 = vector.broadcast %cst_26 : f32 to vector<10x128xf32>
    %128 = arith.cmpf olt, %126, %127 : vector<10x128xf32>
    %cst_27 = arith.constant 5.000000e-01 : f32
    %129 = vector.broadcast %cst_27 : f32 to vector<10x128xf32>
    %130 = arith.mulf %129, %125 : vector<10x128xf32>
    %131 = arith.mulf %130, %125 : vector<10x128xf32>
    %cst_28 = arith.constant 5.000000e-01 : f32
    %132 = vector.broadcast %cst_28 : f32 to vector<10x128xf32>
    %133 = arith.subf %126, %132 : vector<10x128xf32>
    %134 = arith.select %128, %131, %133 : vector<10x128xi1>, vector<10x128xf32>
    %cst_29 = arith.constant dense<0.000000e+00> : vector<128xf32>
    %135 = vector.multi_reduction <add>, %134, %cst_29 [0] : vector<10x128xf32> to vector<128xf32>
    %136 = vector.shape_cast %135 : vector<128xf32> to vector<1x128xf32>
    %137 = arith.mulf %64, %122 : vector<1x128xf32>
    %138 = arith.mulf %64, %136 : vector<1x128xf32>
    %139 = tpu.concatenate %82, %64, %137, %138 in 0 : vector<1x128xf32>, vector<1x128xf32>, vector<1x128xf32>, vector<1x128xf32> -> vector<4x128xf32>
    %cst_30 = arith.constant dense<0.000000e+00> : vector<4xf32>
    %140 = vector.multi_reduction <add>, %139, %cst_30 [1] : vector<4x128xf32> to vector<4xf32>
    %141 = vector.shape_cast %140 : vector<4xf32> to vector<4x1xf32>
    %142 = vector.extract_strided_slice %141 {offsets = [0, 0], sizes = [1, 1], strides = [1, 1]} : vector<4x1xf32> to vector<1x1xf32>
    %143 = vector.extract %142[0, 0] : f32 from vector<1x1xf32>
    %cst_31 = arith.constant 1.280000e+02 : f32
    %144 = arith.divf %143, %cst_31 : f32
    %145 = vector.extract_strided_slice %141 {offsets = [1, 0], sizes = [1, 1], strides = [1, 1]} : vector<4x1xf32> to vector<1x1xf32>
    %146 = vector.extract %145[0, 0] : f32 from vector<1x1xf32>
    %cst_32 = arith.constant 0.000000e+00 : f32
    %147 = arith.cmpf ogt, %146, %cst_32 : f32
    %cst_33 = arith.constant 1.000000e+00 : f32
    %148 = arith.maximumf %146, %cst_33 : f32
    %cst_34 = arith.constant 1.000000e+00 : f32
    %149 = arith.divf %cst_34, %148 : f32
    %150 = vector.extract_strided_slice %141 {offsets = [2, 0], sizes = [1, 1], strides = [1, 1]} : vector<4x1xf32> to vector<1x1xf32>
    %151 = vector.extract %150[0, 0] : f32 from vector<1x1xf32>
    %152 = arith.mulf %151, %149 : f32
    %cst_35 = arith.constant 2.500000e-01 : f32
    %153 = arith.mulf %152, %cst_35 : f32
    %cst_36 = arith.constant 0.000000e+00 : f32
    %154 = arith.select %147, %153, %cst_36 : f32
    %155 = vector.extract_strided_slice %141 {offsets = [3, 0], sizes = [1, 1], strides = [1, 1]} : vector<4x1xf32> to vector<1x1xf32>
    %156 = vector.extract %155[0, 0] : f32 from vector<1x1xf32>
    %157 = arith.mulf %156, %149 : f32
    %cst_37 = arith.constant 1.000000e-01 : f32
    %158 = arith.mulf %157, %cst_37 : f32
    %cst_38 = arith.constant 0.000000e+00 : f32
    %159 = arith.select %147, %158, %cst_38 : f32
    %c0_i32 = arith.constant 0 : i32
    %160 = vector.broadcast %c0_i32 : i32 to vector<1x128xi32>
    %161 = arith.cmpi eq, %11, %160 : vector<1x128xi32>
    %c1_i32 = arith.constant 1 : i32
    %162 = vector.broadcast %c1_i32 : i32 to vector<1x128xi32>
    %163 = arith.cmpi eq, %11, %162 : vector<1x128xi32>
    %c2_i32 = arith.constant 2 : i32
    %164 = vector.broadcast %c2_i32 : i32 to vector<1x128xi32>
    %165 = arith.cmpi eq, %11, %164 : vector<1x128xi32>
    %cst_39 = arith.constant 0.000000e+00 : f32
    %166 = vector.broadcast %159 : f32 to vector<1x128xf32>
    %167 = vector.broadcast %cst_39 : f32 to vector<1x128xf32>
    %168 = arith.select %165, %166, %167 : vector<1x128xi1>, vector<1x128xf32>
    %169 = vector.broadcast %154 : f32 to vector<1x128xf32>
    %170 = arith.select %163, %169, %168 : vector<1x128xi1>, vector<1x128xf32>
    %171 = vector.broadcast %144 : f32 to vector<1x128xf32>
    %172 = arith.select %161, %171, %170 : vector<1x128xi1>, vector<1x128xf32>
    %c0_40 = arith.constant 0 : index
    %c0_41 = arith.constant 0 : index
    %c0_42 = arith.constant 0 : index
    %173 = vector.load %arg5[%c0_40, %c0_41, %c0_42] : memref<1x1x128xf32, #tpu.memory_space<vmem>>, vector<1x1x128xf32>
    %174 = vector.shape_cast %173 : vector<1x1x128xf32> to vector<1x128xf32>
    %175 = vector.shape_cast %172 : vector<1x128xf32> to vector<1x1x128xf32>
    tpu.vector_store %arg5[%c0_40, %c0_41, %c0_42], %175 {strides = array<i32>} : memref<1x1x128xf32, #tpu.memory_space<vmem>>, vector<1x1x128xf32>,
    return
  }
  func.func @transform_0(%arg0: i32) -> (i32, i32) {
    %c0_i32 = arith.constant 0 : i32
    %c0_i32_0 = arith.constant 0 : i32
    %c0_i32_1 = arith.constant 0 : i32
    return %c0_i32, %c0_i32_0 : i32, i32
  }
  func.func @transform_1(%arg0: i32) -> (i32, i32, i32) {
    %c0_i32 = arith.constant 0 : i32
    %c0_i32_0 = arith.constant 0 : i32
    %c0_i32_1 = arith.constant 0 : i32
    return %arg0, %c0_i32, %c0_i32_0 : i32, i32, i32
  }
  func.func @transform_2(%arg0: i32) -> (i32, i32, i32) {
    %c0_i32 = arith.constant 0 : i32
    %c0_i32_0 = arith.constant 0 : i32
    %c0_i32_1 = arith.constant 0 : i32
    return %arg0, %c0_i32, %c0_i32_0 : i32, i32, i32
  }
  func.func @transform_3(%arg0: i32) -> (i32, i32, i32) {
    %c0_i32 = arith.constant 0 : i32
    %c0_i32_0 = arith.constant 0 : i32
    %c0_i32_1 = arith.constant 0 : i32
    return %arg0, %c0_i32, %c0_i32_0 : i32, i32, i32
  }
  func.func @transform_4(%arg0: i32) -> (i32, i32, i32) {
    %c0_i32 = arith.constant 0 : i32
    %c0_i32_0 = arith.constant 0 : i32
    %c0_i32_1 = arith.constant 0 : i32
    return %arg0, %c0_i32, %c0_i32_0 : i32, i32, i32
  }
}

</mosaic_0001>

<llo_original>
// kernel: tpu_custom_call.1
$region0: #{tpu_custom_call.1}
  #allocation0 [shape = 'u32[]', space=smem, size = 0x4, offset = 0x4, fixed_abs, tag = 'smem constant byte address 0x4 - core index']
  #allocation1 [shape = 'u32[72,128]{1,0:T(1,128)}', space=vmem, size = 0x9000, scoped, tag = 'internal scratch']
  %s0 = inlined_call_operand.vmem [shape: f32[8,128], index: 0, kind: input, shape index: {}]
  %s1 = inlined_call_operand.vmem [shape: f32[2,8,4], index: 1, kind: input, shape index: {}]
  %s2 = inlined_call_operand.vmem [shape: f32[2,16,8], index: 2, kind: input, shape index: {}]
  %s3 = inlined_call_operand.vmem [shape: f32[2,16,128], index: 3, kind: input, shape index: {}]
  %s4 = inlined_call_operand.hbm [shape: f32[2,1,128], index: 4, kind: output, shape index: {}]
  %s5 = sld [smem:[#allocation0]]
  $region49: #{tpu_custom_call.1} parent=0
    _
  %s7 = ssub.s32 1, %s5
  %s8 = scalar_select 0, %s7, %s5
  $region1: #{tpu_custom_call.1} parent=0
    #allocation2 [shape = 'u8[1024]{0}', space=vmem, size = 0x400, scoped, tag = 'output window, operand 0']
    #allocation3 [shape = 's32[2]{0}', space=sflag, size = 0x8, scoped, tag = 'scoped memory for tpu_custom_call.1']
    %9 = vsyncpa [#allocation3], 0
    %s10 = scalar_lea.sflag [#allocation3], 1
    %11 = vsyncpa %s10, 0
    loop: start=0, step=1, limit=4
    $region2: #{tpu_custom_call.1} parent=1 // loop_pre_header
      _
    $region3: #{tpu_custom_call.1} parent=1 // loop_header
      %s13 = sphi 0, %s17
      %p14 = scmp.ge.s32.totalorder %s13, 4
      %s21 = sphi 0, %s21
      %s23 = sphi 0, %s21
      %s24 = sphi 0, %s23
      %s38 = sphi 0, %s24
      %s44 = sphi 0, %s46
      %s47 = sphi 0, %s44
      %s48 = sphi 0, %s47
      %s64 = sphi 0, %s48
      %s70 = sphi 0, %s72
      %s73 = sphi 0, %s70
      %s74 = sphi 0, %s73
      %s90 = sphi 0, %s74
      %s96 = sphi 0, %s98
      %s99 = sphi 0, %s96
      %s100 = sphi 0, %s99
      %s116 = sphi 0, %s100
      %s122 = sphi 0, %s124
      %s125 = sphi 0, %s122
      %s126 = sphi 0, %s125
      %s142 = sphi 0, %s126
    $region4: #{tpu_custom_call.1} parent=1 // loop_header_branch
      %16 = sbr.rel (%p14) target = $region8
    $region5: #{tpu_custom_call.1} parent=1 // loop_body
      %s18 = ssub.s32 %s13, 1
      %s19 = ssub.s32 %s13, 2
      %s20 = sadd.s32 %s13, 1
      %s22 = sadd.s32 %s21, 1
      %p25 = scmp.eq.s32.totalorder %s13, 1
      %p26 = scmp.ne.s32.totalorder %s21, %s23
      %p27 = scmp.eq.s32.totalorder %s13, 0
      %p28 = por %p26, %p27
      %p29 = scmp.ne.s32.totalorder %s21, %s23
      %p30 = scmp.eq.s32.totalorder %s18, 1
      %p31 = por %p29, %p30
      %p32 = scmp.ne.s32.totalorder %s23, %s24
      %p33 = scmp.eq.s32.totalorder %s18, 0
      %p34 = por %p32, %p33
      %p35 = scmp.ne.s32.totalorder %s23, %s24
      %p36 = scmp.eq.s32.totalorder %s19, 1
      %p37 = por %p35, %p36
      %p39 = scmp.ne.s32.totalorder %s24, %s38
      %p40 = scmp.eq.s32.totalorder %s19, 0
      %p41 = por %p39, %p40
      %s42 = ssub.s32 %s13, %s20
      %p43 = scmp.eq.s32.totalorder %s42, 0
      %s45 = sadd.s32 %s44, 1
      %s46 = scalar_select %p43, %s44, %s45
      %p49 = pneg %p43
      %p50 = scmp.eq.s32.totalorder %s13, 1
      %p51 = por %p49, %p50
      %p52 = scmp.ne.s32.totalorder %s44, %s47
      %p53 = scmp.eq.s32.totalorder %s13, 0
      %p54 = por %p52, %p53
      %p55 = scmp.ne.s32.totalorder %s44, %s47
      %p56 = scmp.eq.s32.totalorder %s18, 1
      %p57 = por %p55, %p56
      %p58 = scmp.ne.s32.totalorder %s47, %s48
      %p59 = scmp.eq.s32.totalorder %s18, 0
      %p60 = por %p58, %p59
      %p61 = scmp.ne.s32.totalorder %s47, %s48
      %p62 = scmp.eq.s32.totalorder %s19, 1
      %p63 = por %p61, %p62
      %p65 = scmp.ne.s32.totalorder %s48, %s64
      %p66 = scmp.eq.s32.totalorder %s19, 0
      %p67 = por %p65, %p66
      %s68 = ssub.s32 %s13, %s20
      %p69 = scmp.eq.s32.totalorder %s68, 0
      %s71 = sadd.s32 %s70, 1
      %s72 = scalar_select %p69, %s70, %s71
      %p75 = pneg %p69
      %p76 = scmp.eq.s32.totalorder %s13, 1
      %p77 = por %p75, %p76
      %p78 = scmp.ne.s32.totalorder %s70, %s73
      %p79 = scmp.eq.s32.totalorder %s13, 0
      %p80 = por %p78, %p79
      %p81 = scmp.ne.s32.totalorder %s70, %s73
      %p82 = scmp.eq.s32.totalorder %s18, 1
      %p83 = por %p81, %p82
      %p84 = scmp.ne.s32.totalorder %s73, %s74
      %p85 = scmp.eq.s32.totalorder %s18, 0
      %p86 = por %p84, %p85
      %p87 = scmp.ne.s32.totalorder %s73, %s74
      %p88 = scmp.eq.s32.totalorder %s19, 1
      %p89 = por %p87, %p88
      %p91 = scmp.ne.s32.totalorder %s74, %s90
      %p92 = scmp.eq.s32.totalorder %s19, 0
      %p93 = por %p91, %p92
      %s94 = ssub.s32 %s13, %s20
      %p95 = scmp.eq.s32.totalorder %s94, 0
      %s97 = sadd.s32 %s96, 1
      %s98 = scalar_select %p95, %s96, %s97
      %p101 = pneg %p95
      %p102 = scmp.eq.s32.totalorder %s13, 1
      %p103 = por %p101, %p102
      %p104 = scmp.ne.s32.totalorder %s96, %s99
      %p105 = scmp.eq.s32.totalorder %s13, 0
      %p106 = por %p104, %p105
      %p107 = scmp.ne.s32.totalorder %s96, %s99
      %p108 = scmp.eq.s32.totalorder %s18, 1
      %p109 = por %p107, %p108
      %p110 = scmp.ne.s32.totalorder %s99, %s100
      %p111 = scmp.eq.s32.totalorder %s18, 0
      %p112 = por %p110, %p111
      %p113 = scmp.ne.s32.totalorder %s99, %s100
      %p114 = scmp.eq.s32.totalorder %s19, 1
      %p115 = por %p113, %p114
      %p117 = scmp.ne.s32.totalorder %s100, %s116
      %p118 = scmp.eq.s32.totalorder %s19, 0
      %p119 = por %p117, %p118
      %s120 = ssub.s32 %s13, %s20
      %p121 = scmp.eq.s32.totalorder %s120, 0
      %s123 = sadd.s32 %s122, 1
      %s124 = scalar_select %p121, %s122, %s123
      %p127 = pneg %p121
      %p128 = scmp.eq.s32.totalorder %s13, 1
      %p129 = por %p127, %p128
      %p130 = scmp.ne.s32.totalorder %s122, %s125
      %p131 = scmp.eq.s32.totalorder %s13, 0
      %p132 = por %p130, %p131
      %p133 = scmp.ne.s32.totalorder %s122, %s125
      %p134 = scmp.eq.s32.totalorder %s18, 1
      %p135 = por %p133, %p134
      %p136 = scmp.ne.s32.totalorder %s125, %s126
      %p137 = scmp.eq.s32.totalorder %s18, 0
      %p138 = por %p136, %p137
      %p139 = scmp.ne.s32.totalorder %s125, %s126
      %p140 = scmp.eq.s32.totalorder %s19, 1
      %p141 = por %p139, %p140
      %p143 = scmp.ne.s32.totalorder %s126, %s142
      %p144 = scmp.eq.s32.totalorder %s19, 0
      %p145 = por %p143, %p144
      %p146 = scmp.le.s32.totalorder 1, %s13
      %p147 = scmp.lt.s32.totalorder %s13, 3
      %p148 = pnand %p146, %p147
      %p149 = pneg %p148
      // Predicated region
      $region9: #{tpu_custom_call.1} parent=5 // pred_check
        _
      $region10: #{tpu_custom_call.1} parent=5 // pred_check_branch
        %151 = sbr.rel (%p148) target = $region12
      $region11: #{tpu_custom_call.1} parent=5 // pred_region
        %s152 = ssub.s32 %s13, 1
        // Predicated region
        $region13: #{tpu_custom_call.1} parent=11 // pred_check
          %p153 = pneg %p34
        $region14: #{tpu_custom_call.1} parent=11 // pred_check_branch
          %155 = sbr.rel (%p153) target = $region16
        $region15: #{tpu_custom_call.1} parent=11 // pred_region
          _
        $region16: #{tpu_custom_call.1} parent=11 // pred_fallthru
          _
      $region12: #{tpu_custom_call.1} parent=5 // pred_fallthru
        _
      %p156 = scmp.lt.s32.totalorder %s13, 2
      // Predicated region
      $region17: #{tpu_custom_call.1} parent=5 // pred_check
        %p157 = pneg %p156
      $region18: #{tpu_custom_call.1} parent=5 // pred_check_branch
        %159 = sbr.rel (%p157) target = $region20
      $region19: #{tpu_custom_call.1} parent=5 // pred_region
        // Predicated region
        $region21: #{tpu_custom_call.1} parent=19 // pred_check
          %p160 = pneg %p54
        $region22: #{tpu_custom_call.1} parent=19 // pred_check_branch
          %162 = sbr.rel (%p160) target = $region24
        $region23: #{tpu_custom_call.1} parent=19 // pred_region
          %p163 = scmp.lt.s32.totalorder %s13, 1
          %s164 = scalar_select %p163, %s13, 1
          %s165 = smul.addr %s164, 8
          %s166 = scalar_lea.vmem %s1, %s165
        $region24: #{tpu_custom_call.1} parent=19 // pred_fallthru
          _
        // Predicated region
        $region25: #{tpu_custom_call.1} parent=19 // pred_check
          %p167 = pneg %p80
        $region26: #{tpu_custom_call.1} parent=19 // pred_check_branch
          %169 = sbr.rel (%p167) target = $region28
        $region27: #{tpu_custom_call.1} parent=19 // pred_region
          %p170 = scmp.lt.s32.totalorder %s13, 1
          %s171 = scalar_select %p170, %s13, 1
          %s172 = smul.addr %s171, 2
          %s173 = smul.addr %s172, 8
          %s174 = scalar_lea.vmem %s2, %s173
        $region28: #{tpu_custom_call.1} parent=19 // pred_fallthru
          _
        // Predicated region
        $region29: #{tpu_custom_call.1} parent=19 // pred_check
          %p175 = pneg %p106
        $region30: #{tpu_custom_call.1} parent=19 // pred_check_branch
          %177 = sbr.rel (%p175) target = $region32
        $region31: #{tpu_custom_call.1} parent=19 // pred_region
          %p178 = scmp.lt.s32.totalorder %s13, 1
          %s179 = scalar_select %p178, %s13, 1
          %s180 = smul.addr %s179, 2
          %s181 = smul.addr %s180, 8
          %s182 = scalar_lea.vmem %s3, %s181
        $region32: #{tpu_custom_call.1} parent=19 // pred_fallthru
          _
      $region20: #{tpu_custom_call.1} parent=5 // pred_fallthru
        _
      %p183 = scmp.le.s32.totalorder 1, %s13
      %p184 = scmp.lt.s32.totalorder %s13, 3
      %p185 = pnand %p183, %p184
      %p186 = pneg %p185
      // Predicated region
      $region33: #{tpu_custom_call.1} parent=5 // pred_check
        _
      $region34: #{tpu_custom_call.1} parent=5 // pred_check_branch
        %188 = sbr.rel (%p185) target = $region36
      $region35: #{tpu_custom_call.1} parent=5 // pred_region
        %s189 = ssub.s32 %s13, 1
        %p190 = pneg %p34
        %p191 = pneg %p31
        %p192 = scmp.lt.s32.totalorder %s18, 1
        %s193 = scalar_select %p192, %s18, 1
        %s194 = smul.addr %s193, 8
        %s195 = scalar_lea.vmem %s1, %s194
        %p196 = pneg %p60
        %p197 = pneg %p57
        %p198 = scmp.lt.s32.totalorder %s18, 1
        %s199 = scalar_select %p198, %s18, 1
        %s200 = smul.addr %s199, 2
        %s201 = smul.addr %s200, 8
        %s202 = scalar_lea.vmem %s2, %s201
        %p203 = pneg %p86
        %p204 = pneg %p83
        %p205 = scmp.lt.s32.totalorder %s18, 1
        %s206 = scalar_select %p205, %s18, 1
        %s207 = smul.addr %s206, 2
        %s208 = smul.addr %s207, 8
        %s209 = scalar_lea.vmem %s3, %s208
        %p210 = pneg %p112
        %p211 = pneg %p109
        %p212 = pneg %p138
        %p213 = pneg %p135
        %s214 = sand.u32 %s125, 1
        %s215 = scalar_lea.sflag [#allocation3], %s214
        %s216 = sand.u32 %s125, 1
        %s217 = scalar_lea.vmem [#allocation2], %s216
        %p218 = scmp.lt.s32.totalorder %s18, 1
        %s219 = scalar_select %p218, %s18, 1
        %s220 = smul.addr %s219, 8
        %s221 = scalar_lea.vmem %s1, %s220
        %p222 = scmp.lt.s32.totalorder %s18, 1
        %s223 = scalar_select %p222, %s18, 1
        %s224 = smul.addr %s223, 2
        %s225 = smul.addr %s224, 8
        %s226 = scalar_lea.vmem %s2, %s225
        %p227 = scmp.lt.s32.totalorder %s18, 1
        %s228 = scalar_select %p227, %s18, 1
        %s229 = smul.addr %s228, 2
        %s230 = smul.addr %s229, 8
        %s231 = scalar_lea.vmem %s3, %s230
        %v233 = vld [vmem:[%s0] sm:$0xff]
        %v235 = vrot.slane %v233, 1
        %v237 = vmul.f32 %v233, %v235
        %v238 = vlaneseq
        %v239 = vshrl.u32 %v238, 7
        %v240 = vlaneseq
        %v241 = vand.u32 %v240, 127
        %v242 = vld [vmem:[%s221] sm:$0xff]
        %v243 = vld [vmem:[%s226] sm:$0xff]
        %v244 = vld [vmem:[%s226 + $0x8] sm:$0xff]
        %v245 = vld [vmem:[%s231] sm:$0xff]
        %v246 = vld [vmem:[%s231 + $0x8] sm:$0xff]
        %v247 = vperm.slane %v233, 2
        %249 = vset.pattern.permute.xlu0 2
        %250 = vperm.xlu0 %249, %v242
        %v251 = vpop.permute.xlu0 %250
        %v253 = vmin.f32 %v247, %v251
        %v254 = vperm.slane %v233, 0
        %255 = vset.pattern.permute.xlu0 0
        %256 = vperm.xlu0 %255, %v242
        %v257 = vpop.permute.xlu0 %256
        %v259 = vmax.f32 %v254, %v257
        %v260 = vsub.f32 %v253, %v259
        %v261 = vmax.f32 %v260, 0.0
        %v262 = vperm.slane %v233, 3
        %263 = vset.pattern.permute.xlu0 3
        %264 = vperm.xlu0 %263, %v242
        %v265 = vpop.permute.xlu0 %264
        %v267 = vmin.f32 %v262, %v265
        %v268 = vperm.slane %v233, 1
        %269 = vset.pattern.permute.xlu0 1
        %270 = vperm.xlu0 %269, %v242
        %v271 = vpop.permute.xlu0 %270
        %v273 = vmax.f32 %v268, %v271
        %v274 = vsub.f32 %v267, %v273
        %v275 = vmax.f32 %v274, 0.0
        %v276 = vmul.f32 %v261, %v275
        %277 = vrot.lane.b32.xlu0 %v242, 2
        %v278 = vpop.permute.xlu0 %277
        %v280 = vsub.f32 %v242, %v278
        %282 = vrot.lane.b32.xlu0 %v280, 127
        %v283 = vpop.permute.xlu0 %282
        %v285 = vmul.f32 %v280, %v283
        %v286 = vperm.slane %v237, 4
        %288 = vset.pattern.permute.xlu0 2
        %289 = vperm.xlu0 %288, %v285
        %v290 = vpop.permute.xlu0 %289
        %v292 = vadd.f32 %v286, %v290
        %v293 = vsub.f32 %v292, %v276
        %v294 = vrcp.pop %v293
        %v295 = vmul.f32 %v293, %v294
        %v296 = vsub.f32 1.0, %v295
        %v297 = vmul.f32 %v294, %v296
        %v298 = vadd.f32 %v294, %v297
        %vm299 = vweird.f32 %v293
        %vm300 = vweird.f32 %v294
        %vm301 = vmor %vm299, %vm300
        %v302 = vsel %vm301, %v294, %v298
        %v303 = vand.u32 2147483647, %v293
        %vm304 = vcmp.eq.f32.partialorder %v303, 8.507059e+37
        %v305 = vand.u32 %v293, 2147483648
        %v306 = vor.u32 1.1754944e-38, %v305
        %v307 = vsel %vm304, %v306, %v302
        %v308 = vmul.f32 %v276, %v307
        %v309 = vrot.slane %v308, 4
        %v310 = vmax.f32 %v308, %v309
        %v311 = vrot.slane %v310, 2
        %v312 = vmax.f32 %v310, %v311
        %v313 = vrot.slane %v312, 1
        %v314 = vmax.f32 %v312, %v313
        %vm315 = vcmp.eq.f32.partialorder %v308, %v314
        %v316 = vsel %vm315, %v239, 8
        %v317 = vrot.slane %v316, 4
        %vm318 = vcmp.lt.s32.totalorder %v316, %v317
        %v319 = vsel %vm318, %v316, %v317
        %v320 = vrot.slane %v319, 2
        %vm321 = vcmp.lt.s32.totalorder %v319, %v320
        %v322 = vsel %vm321, %v319, %v320
        %v323 = vrot.slane %v322, 1
        %vm324 = vcmp.lt.s32.totalorder %v322, %v323
        %v325 = vsel %vm324, %v322, %v323
        %vm326 = vcmp.eq.s32.totalorder %v239, %v325
        %v327 = vsel %vm326, 1, 0
        %v328 = vcvt.s32.f32 %v327
        %vm329 = vcmp.ge.f32.partialorder %v314, 0.5
        %v330 = vsel %vm329, 1, 0
        %v331 = vcvt.s32.f32 %v330
        %v333 = vrot.slane %v245, 7
        %v335 = vsub.f32 %v245, %v333
        %v336 = vmul.f32 %v331, 2.0
        %v337 = vsub.f32 1.0, %v336
        %v338 = vmul.f32 %v337, %v335
        %v339 = vmax.f32 %v338, 0.0
        %v340 = vand.u32 2147483647, %v338
        %v341 = vsub.f32 0.0, %v340
        %v342 = vmul.f32 %v341, 1.442695
        %v343 = vpow.pop %v342
        %v344 = vadd.f32 %v343, 1.0
        %v345 = vlog2.pop %v344
        %v346 = vmul.f32 %v345, 0.6931472
        %v347 = vadd.f32 %v339, %v346
        %v348 = vpack.c.bf16 %v243, %v243
        %v349 = vpack.c.bf16 %v244, %v244
        %v350 = vunpack.c.l.bf16 %v348
        %v351 = vunpack.c.l.bf16 %v349
        %v352 = vsub.f32 %v243, %v350
        %v353 = vsub.f32 %v244, %v351
        %v354 = vpack.c.bf16 %v352, %v352
        %v355 = vpack.c.bf16 %v353, %v353
        %v356 = vunpack.c.l.bf16 %v354
        %v357 = vunpack.c.l.bf16 %v355
        %v358 = vsub.f32 %v352, %v356
        %v359 = vsub.f32 %v353, %v357
        %v360 = vpack.c.bf16 %v358, %v358
        %v361 = vpack.c.bf16 %v359, %v359
        %v364 = vunpack.c.l.b16 %v348
        %v365 = vunpack.c.l.b16 %v349
        %v366 = vpack.c.b16 %v365, %v364
        %v369 = vunpack.c.l.b16 %v354
        %v370 = vunpack.c.l.b16 %v355
        %v371 = vpack.c.b16 %v370, %v369
        %372 = vrot.lane.b32.xlu0 %v371, 8
        %v373 = vpop.permute.xlu0 %372
        %v376 = vunpack.c.l.b16 %v360
        %v377 = vunpack.c.l.b16 %v361
        %v378 = vpack.c.b16 %v377, %v376
        %379 = vrot.lane.b32.xlu0 %v378, 16
        %v380 = vpop.permute.xlu0 %379
        %vm381 = vcmask 64512
        %v384 = vsel %vm381, %v366, %v373
        %vm385 = vcmask 130048
        %v387 = vsel %vm385, %v384, %v380
        %v388 = vpack.c.bf16 %v328, %v328
        %vm389 = vcmask 195584
        %v390 = vsel %vm389, %v387, 0
        %vm392 = vcmask 1043456
        %v394 = vsel %vm392, %v388, 0
        %396 = vmatpush.bf16.msra.mxu0 0
        %397 = vmatpush.bf16.msra.mxu0 0
        %398 = vmatpush.bf16.msra.mxu0 0
        %399 = vmatpush.bf16.msra.mxu0 0
        %400 = vmatpush.bf16.msra.mxu0 0
        %401 = vmatpush.bf16.msra.mxu0 0
        %402 = vmatpush.bf16.msra.mxu0 %v394
        %403 = vmatpush.bf16.msra.mxu0 %v388
        %404 = vmatmul.bf16.gmra.mxu0 %v390
        %v405 = vpop.f32.mrf.mxu0
        %v406 = vadd.f32 0.0, %v405
        %v407 = vpop.f32.mrf.mxu0
        %v408 = vadd.f32 0.0, %v407
        %409 = vdwg.mxu0
        %v411 = vrot.slane %v406, 6
        %v413 = vsub.f32 %v406, %v411
        %v414 = vmul.f32 %v413, 0.5
        %v416 = vrot.slane %v414, 2
        %v418 = vadd.f32 %v406, %v416
        %v419 = vrot.slane %v233, 6
        %v421 = vsub.f32 %v418, %v419
        %v422 = vrot.slane %v233, 4
        %v424 = vrcp.pop %v422
        %v425 = vmul.f32 %v422, %v424
        %v426 = vsub.f32 1.0, %v425
        %v427 = vmul.f32 %v424, %v426
        %v428 = vadd.f32 %v424, %v427
        %vm429 = vweird.f32 %v422
        %vm430 = vweird.f32 %v424
        %vm431 = vmor %vm429, %vm430
        %v432 = vsel %vm431, %v424, %v428
        %v433 = vand.u32 2147483647, %v422
        %vm434 = vcmp.eq.f32.partialorder %v433, 8.507059e+37
        %v435 = vand.u32 %v422, 2147483648
        %v436 = vor.u32 1.1754944e-38, %v435
        %v437 = vsel %vm434, %v436, %v432
        %v438 = vmul.f32 %v421, %v437
        %v439 = vrot.slane %v233, 2
        %v441 = vrcp.pop %v439
        %v442 = vmul.f32 %v439, %v441
        %v443 = vsub.f32 1.0, %v442
        %v444 = vmul.f32 %v441, %v443
        %v445 = vadd.f32 %v441, %v444
        %vm446 = vweird.f32 %v439
        %vm447 = vweird.f32 %v441
        %vm448 = vmor %vm446, %vm447
        %v449 = vsel %vm448, %v441, %v445
        %v450 = vand.u32 2147483647, %v439
        %vm451 = vcmp.eq.f32.partialorder %v450, 8.507059e+37
        %v452 = vand.u32 %v439, 2147483648
        %v453 = vor.u32 1.1754944e-38, %v452
        %v454 = vsel %vm451, %v453, %v449
        %v455 = vmul.f32 %v413, %v454
        %vm456 = vcmp.eq.s32.totalorder %v330, 1
        %v457 = vsel %vm456, %v455, 1.0
        %v458 = vlog2.pop %v457
        %v459 = vmul.f32 %v458, 0.6931472
        %vm460 = vcmask 1041408
        %v461 = vsel %vm460, %v438, %v459
        %v463 = vrot.slane %v461, 6
        %v465 = vsub.f32 %v245, %v463
        %v466 = vand.u32 2147483647, %v465
        %vm467 = vcmp.lt.f32.partialorder %v466, 1.0
        %v468 = vmul.f32 %v465, 0.5
        %v469 = vmul.f32 %v468, %v465
        %v470 = vsub.f32 %v466, 0.5
        %v471 = vsel %vm467, %v469, %v470
        %v473 = vrot.slane %v471, 2
        %v475 = vsel %vm392, %v473, 0.0
        %v476 = vrot.slane %v475, 4
        %v477 = vadd.f32 %v475, %v476
        %v478 = vrot.slane %v477, 2
        %v479 = vadd.f32 %v477, %v478
        %v480 = vrot.slane %v479, 1
        %v481 = vadd.f32 %v479, %v480
        %v483 = vrot.slane %v408, 6
        %v484 = vsel %vm460, %v411, %v483
        %v486 = vsub.f32 %v245, %v411
        %v487 = vsub.f32 %v246, %v484
        %v488 = vand.u32 2147483647, %v486
        %v489 = vand.u32 2147483647, %v487
        %vm490 = vcmp.lt.f32.partialorder %v488, 1.0
        %vm491 = vcmp.lt.f32.partialorder %v489, 1.0
        %v492 = vmul.f32 %v486, 0.5
        %v493 = vmul.f32 %v487, 0.5
        %v494 = vmul.f32 %v492, %v486
        %v495 = vmul.f32 %v493, %v487
        %v496 = vsub.f32 %v488, 0.5
        %v497 = vsub.f32 %v489, 0.5
        %v498 = vsel %vm490, %v494, %v496
        %v499 = vsel %vm491, %v495, %v497
        %v502 = vrot.slane %v498, 6
        %v503 = vrot.slane %v499, 6
        %v504 = vsel %vm460, %v502, %v503
        %v507 = vsel %vm460, %v503, 0.0
        %v508 = vadd.f32 %v504, %v507
        %v509 = vrot.slane %v508, 4
        %v510 = vadd.f32 %v508, %v509
        %v511 = vrot.slane %v510, 2
        %v512 = vadd.f32 %v510, %v511
        %v513 = vrot.slane %v512, 1
        %v514 = vadd.f32 %v512, %v513
        %v515 = vmul.f32 %v331, %v481
        %v516 = vmul.f32 %v331, %v514
        %v518 = vrot.slane %v347, 1
        %vm520 = vcmask 1040384
        %v521 = vsel %vm520, %v518, %v331
        %v522 = vsel %vm460, %v521, %v515
        %vm523 = vcmask 1042432
        %v524 = vsel %vm523, %v522, %v516
        %v525 = vsel %vm392, %v524, 0.0
        %526 = vadd.xlane.f32.xlu0 %v525
        %v527 = vpop.xlane.xlu0 %526
        %s528 = vtos %v527
        %v529 = vrcp.pop 128.0
        %v530 = vmul.f32 128.0, %v529
        %v531 = vsub.f32 1.0, %v530
        %v532 = vmul.f32 %v529, %v531
        %v533 = vadd.f32 %v529, %v532
        %vm534 = vweird.f32 %v529
        %v535 = vsel %vm534, %v529, %v533
        %s536 = vtos %v535
        %s537 = smul.f32 %s528, %s536
        %v538 = vrot.slane %v527, 1
        %s539 = vtos %v538
        %p540 = scmp.gt.f32.partialorder %s539, 0.0
        %s541 = smax.f32 %s539, 1.0
        %v542 = vstv %s541
        %v543 = vrcp.pop %v542
        %v544 = vmul.f32 %v542, %v543
        %v545 = vsub.f32 1.0, %v544
        %v546 = vmul.f32 %v543, %v545
        %v547 = vadd.f32 %v543, %v546
        %vm548 = vweird.f32 %v542
        %vm549 = vweird.f32 %v543
        %vm550 = vmor %vm548, %vm549
        %v551 = vsel %vm550, %v543, %v547
        %v552 = vand.u32 2147483647, %v542
        %vm553 = vcmp.eq.f32.partialorder %v552, 8.507059e+37
        %v554 = vand.u32 %v542, 2147483648
        %v555 = vor.u32 1.1754944e-38, %v554
        %v556 = vsel %vm553, %v555, %v551
        %s557 = vtos %v556
        %v558 = vrot.slane %v527, 2
        %s559 = vtos %v558
        %s560 = smul.f32 %s559, %s557
        %s561 = smul.f32 %s560, 0.25
        %s562 = scalar_select %p540, %s561, 0.0
        %v563 = vrot.slane %v527, 3
        %s564 = vtos %v563
        %s565 = smul.f32 %s564, %s557
        %s566 = smul.f32 %s565, 0.1
        %s567 = scalar_select %p540, %s566, 0.0
        %vm568 = vcmp.eq.s32.totalorder %v241, 0
        %vm569 = vcmp.eq.s32.totalorder %v241, 1
        %vm570 = vcmp.eq.s32.totalorder %v241, 2
        %v571 = vstv %s567
        %v572 = vsel %vm570, %v571, 0.0
        %v573 = vstv %s562
        %v574 = vsel %vm569, %v573, %v572
        %v575 = vstv %s537
        %v576 = vsel %vm568, %v575, %v574
        %577 = vst [vmem:[%s217] sm:$0x1] %v576
        %s578 = sand.u32 %s125, 1
        %s579 = scalar_lea.sflag [#allocation3], %s578
        %s580 = sand.u32 %s125, 1
        %s581 = scalar_lea.vmem [#allocation2], %s580
        // Predicated region
        $region37: #{tpu_custom_call.1} parent=35 // pred_check
          %p582 = pneg %p135
        $region38: #{tpu_custom_call.1} parent=35 // pred_check_branch
          %584 = sbr.rel (%p582) target = $region40
        $region39: #{tpu_custom_call.1} parent=35 // pred_region
          %586 = vsyncadd %s579, 0
          %s587 = scalar_lea.hbm %s4, %s18
          %s589 = sshll.u32 %s581, 4
          %s590 = int_to_ptr.vmem [resolvable:$true] %s589
          %s591 = sshll.u32 %s587, 4
          %s592 = int_to_ptr.hbm [resolvable:$true] %s591
          %594 = dma.vmem_to_hbm [thread:$0]  %s590, 16, %s592, %s579
        $region40: #{tpu_custom_call.1} parent=35 // pred_fallthru
          _
      $region36: #{tpu_custom_call.1} parent=5 // pred_fallthru
        _
      %p595 = scmp.le.s32.totalorder 2, %s13
      // Predicated region
      $region41: #{tpu_custom_call.1} parent=5 // pred_check
        %p596 = pneg %p595
      $region42: #{tpu_custom_call.1} parent=5 // pred_check_branch
        %598 = sbr.rel (%p596) target = $region44
      $region43: #{tpu_custom_call.1} parent=5 // pred_region
        %s599 = ssub.s32 %s13, 2
        // Predicated region
        $region45: #{tpu_custom_call.1} parent=43 // pred_check
          %p600 = pneg %p141
        $region46: #{tpu_custom_call.1} parent=43 // pred_check_branch
          %602 = sbr.rel (%p600) target = $region48
        $region47: #{tpu_custom_call.1} parent=43 // pred_region
          %s603 = sand.u32 %s126, 1
          %s604 = scalar_lea.sflag [#allocation3], %s603
          %s605 = sand.u32 %s126, 1
          %s606 = scalar_lea.vmem [#allocation2], %s605
          %608 = dma.done %s604, 16
        $region48: #{tpu_custom_call.1} parent=43 // pred_fallthru
          _
      $region44: #{tpu_custom_call.1} parent=5 // pred_fallthru
        _
    $region6: #{tpu_custom_call.1} parent=1 // loop_footer
      %s17 = sadd.s32 1, %s13
    $region7: #{tpu_custom_call.1} parent=1 // loop_footer_branch
      %12 = sbr.rel target = $region3
    $region8: #{tpu_custom_call.1} parent=1 // loop_exit
      _
    %609 = vsyncpa [#allocation3], 1
    %s610 = scalar_lea.sflag [#allocation3], 1
    %611 = vsyncpa %s610, 1

</llo_original>
